<compile_context>
chip_gen: v5e
topology: v5e:2x2
jax: 0.10.0
libtpu: 0.0.40
codegen_flags: <defaults>
</compile_context>

<pallas_src>
import functools

import jax
import jax.numpy as jnp
import numpy as np
from jax.experimental import pallas as pl
from jax.experimental.pallas import tpu as pltpu

_TARGET_STEP_BYTES = 4 * 1024 * 1024   # HBM bytes moved per grid step (amortizes ~0.35us/step)
_MIN_STEP_BYTES = 512 * 1024           # don't split into steps smaller than this
_MIN_GRID_STEPS = 8                    # keep v7x's 2 TCs busy + pipeline full when rows allow


def _cdiv(a, b):
    return -(-a // b)


def _align_up(x, a):
    return ((x + a - 1) // a) * a


def _sublane_align(itemsize):
    # sublane tile: 8 for 32-bit, 16 for 16-bit, 32 for 8-bit dtypes
    return {4: 8, 2: 16, 1: 32}.get(int(itemsize), 8)


@functools.lru_cache(maxsize=1)
def _vmem_budgets():
    """(working-set budget, vmem_limit_bytes) — generation aware."""
    phys = 128 * 1024 * 1024
    try:
        info = pltpu.get_tpu_info()
        cap = getattr(info, "vmem_capacity_bytes", None)
        if cap:
            phys = int(cap)
    except Exception:
        pass
    if phys <= 64 * 1024 * 1024:                   # v7x-class: 64 MiB VMEM
        return 20 * 1024 * 1024, 40 * 1024 * 1024
    return 24 * 1024 * 1024, 48 * 1024 * 1024      # v5e / v6e: 128 MiB physical


def _make_cat_kernel(last_dims):
    """Write each input tile into its static lane slice of the output tile."""
    offsets = np.concatenate([[0], np.cumsum(last_dims)]).astype(int)

    def kernel(*refs):
        # refs = (in_ref_0, ..., in_ref_{n-1}, out_ref)
        out_ref = refs[-1]
        for i, d in enumerate(last_dims):
            lo = int(offsets[i])
            # Cast on the VPU in-kernel (hidden under DMA for this HBM-bound copy).
            out_ref[:, lo:lo + d] = refs[i][...].astype(out_ref.dtype)

    return kernel


def _choose_block_rows(rows, hbm_bytes_per_row, vmem_bytes_per_row, row_align,
                       vmem_budget):
    """Row tile sized by bytes-per-step + VMEM budget + min-grid-steps."""
    vmem_cap = max(row_align, vmem_budget // max(1, vmem_bytes_per_row))
    target = max(row_align, _TARGET_STEP_BYTES // max(1, hbm_bytes_per_row))
    cap = min(vmem_cap, target)
    # Keep >= _MIN_GRID_STEPS grid steps when each step would still move
    # enough bytes (megacore sharding + DMA overlap), else don't split.
    min_step_rows = max(row_align, _MIN_STEP_BYTES // max(1, hbm_bytes_per_row))
    if rows // _MIN_GRID_STEPS >= min_step_rows:
        cap = min(cap, _align_up(_cdiv(rows, _MIN_GRID_STEPS), row_align))
    if rows <= cap:
        return rows  # single full-extent block: always layout-legal
    cap = max((cap // row_align) * row_align, row_align)
    # Prefer an aligned tile that divides `rows` evenly (no ragged tail).
    for cand in range(cap, row_align - 1, -row_align):
        if rows % cand == 0:
            return cand
    return cap  # ragged last block; Pallas bounds the partial block


@functools.lru_cache(maxsize=None)
def _build_cat_call(last_dims, in_dtype_names, rows, out_dtype_name):
    """Build (once per signature) the jitted pallas_call for cat(dim=-1)."""
    out_dtype = jnp.dtype(out_dtype_name)
    in_dtypes = [jnp.dtype(n) for n in in_dtype_names]
    total = int(sum(last_dims))

    in_bytes_per_row = sum(d * dt.itemsize for d, dt in zip(last_dims, in_dtypes))
    hbm_bytes_per_row = in_bytes_per_row + total * out_dtype.itemsize
    vmem_bytes_per_row = 2 * hbm_bytes_per_row  # double-buffered input + output tiles
    row_align = max([_sublane_align(out_dtype.itemsize)]
                    + [_sublane_align(dt.itemsize) for dt in in_dtypes])

    working_budget, vmem_limit = _vmem_budgets()
    block_rows = _choose_block_rows(rows, hbm_bytes_per_row, vmem_bytes_per_row,
                                    row_align, working_budget)
    grid = (pl.cdiv(rows, block_rows),)

    kernel = _make_cat_kernel(last_dims)
    in_specs = [
        pl.BlockSpec((block_rows, int(d)), lambda r: (r, 0)) for d in last_dims
    ]
    out_spec = pl.BlockSpec((block_rows, total), lambda r: (r, 0))

    call = pl.pallas_call(
        kernel,
        out_shape=jax.ShapeDtypeStruct((rows, total), out_dtype),
        grid=grid,
        in_specs=in_specs,
        out_specs=out_spec,
        compiler_params=pltpu.CompilerParams(
            # Row blocks are fully independent -> shard across both
            # TensorCores on v7x; harmless no-op on single-TC v5e/v6e.
            dimension_semantics=("parallel",),
            vmem_limit_bytes=vmem_limit,
        ),
    )
    return jax.jit(call)


def cat(xs):
    """Equivalent of torch.cat(xs, dim=-1) for a list/tuple of JAX arrays."""
    xs = list(xs)
    assert len(xs) >= 1, "cat needs at least one input"
    lead = xs[0].shape[:-1]
    for x in xs:
        assert x.shape[:-1] == lead, "leading dims must match for cat(dim=-1)"

    out_dtype = jnp.result_type(*[x.dtype for x in xs])
    total = int(sum(int(x.shape[-1]) for x in xs))
    rows = int(np.prod(lead)) if lead else 1

    # torch.cat accepts zero-width pieces; they contribute nothing.
    xs = [x for x in xs if int(x.shape[-1]) > 0]
    if total == 0 or rows == 0 or not xs:
        return jnp.zeros((*lead, total), dtype=out_dtype)

    last_dims = tuple(int(x.shape[-1]) for x in xs)
    in_dtype_names = tuple(jnp.dtype(x.dtype).name for x in xs)
    # No wrapper-side astype: promotion happens inside the kernel.
    flat = [x.reshape(rows, d) for x, d in zip(xs, last_dims)]

    call = _build_cat_call(last_dims, in_dtype_names, rows,
                           jnp.dtype(out_dtype).name)
    out = call(*flat)
    return out.reshape(*lead, total)


if __name__ == "__main__":
    key = jax.random.PRNGKey(0)
    k1, k2, k3, k4, k5, k6, k7, k8 = jax.random.split(key, 8)

    # Test 1: small NCHW-style tensors (single-block path).
    x1 = jax.random.normal(k1, (2, 4, 16, 16), dtype=jnp.float32)
    x2 = jax.random.normal(k2, (2, 4, 16, 8), dtype=jnp.float32)
    x3 = jax.random.normal(k3, (2, 4, 16, 32), dtype=jnp.float32)
    out = jax.block_until_ready(cat([x1, x2, x3]))
    ref = jnp.concatenate([x1, x2, x3], axis=-1)
    assert out.shape == (2, 4, 16, 56), out.shape
    np.testing.assert_allclose(np.asarray(out), np.asarray(ref), rtol=0, atol=0)

    # Test 2: mixed dtypes -> promotion done inside the kernel.
    m1 = jax.random.normal(k4, (2, 4, 16, 16), dtype=jnp.float32)
    m2 = jax.random.normal(k5, (2, 4, 16, 8), dtype=jnp.bfloat16)
    out2 = jax.block_until_ready(cat([m1, m2]))
    ref2 = jnp.concatenate([m1, m2], axis=-1)
    assert out2.dtype == ref2.dtype and out2.shape == (2, 4, 16, 24)
    np.testing.assert_allclose(np.asarray(out2), np.asarray(ref2), rtol=0, atol=0)

    # Test 3: rows (3*5*7 = 105) not a multiple of the sublane alignment
    # (single full-extent block path).
    r1 = jax.random.normal(k6, (3, 5, 7, 16), dtype=jnp.float32)
    r2 = jax.random.normal(k7, (3, 5, 7, 24), dtype=jnp.float32)
    out3 = jax.block_until_ready(cat([r1, r2]))
    ref3 = jnp.concatenate([r1, r2], axis=-1)
    assert out3.shape == (3, 5, 7, 40), out3.shape
    np.testing.assert_allclose(np.asarray(out3), np.asarray(ref3), rtol=0, atol=0)

    # Test 4: wide concat with 300 rows -> multi-step pipelined grid
    # (grid of ~8 steps) including a ragged (partial) last block.
    g1 = jax.random.normal(k8, (2, 150, 2048), dtype=jnp.float32)
    g2 = jax.random.normal(k1, (2, 150, 2048), dtype=jnp.float32)
    out4 = jax.block_until_ready(cat([g1, g2]))
    ref4 = jnp.concatenate([g1, g2], axis=-1)
    assert out4.shape == (2, 150, 4096), out4.shape
    np.testing.assert_allclose(np.asarray(out4), np.asarray(ref4), rtol=0, atol=0)

    # Test 5: zero-width input is accepted (like torch.cat).
    z = jnp.zeros((2, 4, 16, 0), dtype=jnp.float32)
    out5 = jax.block_until_ready(cat([x1, z, x2]))
    ref5 = jnp.concatenate([x1, x2], axis=-1)
    np.testing.assert_allclose(np.asarray(out5), np.asarray(ref5), rtol=0, atol=0)

    print("KERNEL_OK")
</pallas_src>

<mosaic_0001>
module attributes {stable_mosaic.version = 11 : i64} {
  func.func @kernel(%arg0: i32, %arg1: memref<128x16xf32, #tpu.memory_space<vmem>>, %arg2: memref<128x8xf32, #tpu.memory_space<vmem>>, %arg3: memref<128x32xf32, #tpu.memory_space<vmem>>, %arg4: memref<128x56xf32, #tpu.memory_space<vmem>>) attributes {dimension_semantics = [#tpu.dimension_semantics<parallel>], iteration_bounds = array<i64: 1>, scalar_prefetch = 0 : i64, scratch_operands = 0 : i64, tpu.core_type = #tpu.core_type<tc>, window_params = [{transform_indices = @transform_0, window_bounds = array<i64: 128, 16>}, {transform_indices = @transform_1, window_bounds = array<i64: 128, 8>}, {transform_indices = @transform_2, window_bounds = array<i64: 128, 32>}, {transform_indices = @transform_3, window_bounds = array<i64: 128, 56>}]} {
    %c0 = arith.constant 0 : index
    %c0_0 = arith.constant 0 : index
    %0 = vector.load %arg1[%c0, %c0_0] : memref<128x16xf32, #tpu.memory_space<vmem>>, vector<128x16xf32>
    %c0_1 = arith.constant 0 : index
    %c0_2 = arith.constant 0 : index
    %1 = vector.load %arg4[%c0_1, %c0_2] : memref<128x56xf32, #tpu.memory_space<vmem>>, vector<128x16xf32>
    tpu.vector_store %arg4[%c0_1, %c0_2], %0 {strides = array<i32>} : memref<128x56xf32, #tpu.memory_space<vmem>>, vector<128x16xf32>,
    %c0_3 = arith.constant 0 : index
    %c0_4 = arith.constant 0 : index
    %2 = vector.load %arg2[%c0_3, %c0_4] : memref<128x8xf32, #tpu.memory_space<vmem>>, vector<128x8xf32>
    %c0_5 = arith.constant 0 : index
    %c16 = arith.constant 16 : index
    %3 = vector.load %arg4[%c0_5, %c16] : memref<128x56xf32, #tpu.memory_space<vmem>>, vector<128x8xf32>
    tpu.vector_store %arg4[%c0_5, %c16], %2 {strides = array<i32>} : memref<128x56xf32, #tpu.memory_space<vmem>>, vector<128x8xf32>,
    %c0_6 = arith.constant 0 : index
    %c0_7 = arith.constant 0 : index
    %4 = vector.load %arg3[%c0_6, %c0_7] : memref<128x32xf32, #tpu.memory_space<vmem>>, vector<128x32xf32>
    %c0_8 = arith.constant 0 : index
    %c24 = arith.constant 24 : index
    %5 = vector.load %arg4[%c0_8, %c24] : memref<128x56xf32, #tpu.memory_space<vmem>>, vector<128x32xf32>
    tpu.vector_store %arg4[%c0_8, %c24], %4 {strides = array<i32>} : memref<128x56xf32, #tpu.memory_space<vmem>>, vector<128x32xf32>,
    return
  }
  func.func @transform_0(%arg0: i32) -> (i32, i32) {
    %c0_i32 = arith.constant 0 : i32
    %c0_i32_0 = arith.constant 0 : i32
    return %arg0, %c0_i32 : i32, i32
  }
  func.func @transform_1(%arg0: i32) -> (i32, i32) {
    %c0_i32 = arith.constant 0 : i32
    %c0_i32_0 = arith.constant 0 : i32
    return %arg0, %c0_i32 : i32, i32
  }
  func.func @transform_2(%arg0: i32) -> (i32, i32) {
    %c0_i32 = arith.constant 0 : i32
    %c0_i32_0 = arith.constant 0 : i32
    return %arg0, %c0_i32 : i32, i32
  }
  func.func @transform_3(%arg0: i32) -> (i32, i32) {
    %c0_i32 = arith.constant 0 : i32
    %c0_i32_0 = arith.constant 0 : i32
    return %arg0, %c0_i32 : i32, i32
  }
}

</mosaic_0001>

<llo_original>
// kernel: tpu_custom_call.1
$region0: #{tpu_custom_call.1}
  #allocation0 [shape = 'u32[]', space=smem, size = 0x4, offset = 0x4, fixed_abs, tag = 'smem constant byte address 0x4 - core index']
  #allocation1 [shape = 'u32[72,128]{1,0:T(1,128)}', space=vmem, size = 0x9000, scoped, tag = 'internal scratch']
  %s0 = inlined_call_operand.vmem [shape: f32[128,16], index: 0, kind: input, shape index: {}]
  %s1 = inlined_call_operand.vmem [shape: f32[128,8], index: 1, kind: input, shape index: {}]
  %s2 = inlined_call_operand.vmem [shape: f32[128,32], index: 2, kind: input, shape index: {}]
  %s3 = inlined_call_operand.vmem [shape: f32[128,56], index: 3, kind: output, shape index: {}]
  %s4 = sld [smem:[#allocation0]]
  $region22: #{tpu_custom_call.1} parent=0
    _
  %s6 = ssub.s32 1, %s4
  %s7 = scalar_select 0, %s6, %s4
  // Predicated region
  $region2: #{tpu_custom_call.1} parent=0 // pred_check
    _
  $region3: #{tpu_custom_call.1} parent=0 // pred_check_branch
    %9 = sbr.rel (0) target = $region5
  $region4: #{tpu_custom_call.1} parent=0 // pred_region
    _
  $region5: #{tpu_custom_call.1} parent=0 // pred_fallthru
    _
  // Predicated region
  $region6: #{tpu_custom_call.1} parent=0 // pred_check
    _
  $region7: #{tpu_custom_call.1} parent=0 // pred_check_branch
    %11 = sbr.rel (0) target = $region9
  $region8: #{tpu_custom_call.1} parent=0 // pred_region
    _
  $region9: #{tpu_custom_call.1} parent=0 // pred_fallthru
    _
  // Predicated region
  $region10: #{tpu_custom_call.1} parent=0 // pred_check
    _
  $region11: #{tpu_custom_call.1} parent=0 // pred_check_branch
    %13 = sbr.rel (0) target = $region13
  $region12: #{tpu_custom_call.1} parent=0 // pred_region
    _
  $region13: #{tpu_custom_call.1} parent=0 // pred_fallthru
    _
  %v14 = vld [vmem:[%s0] sm:$0xff]
  %v15 = vld [vmem:[%s0 + $0x8] sm:$0xff]
  %v16 = vld [vmem:[%s0 + $0x10] sm:$0xff]
  %v17 = vld [vmem:[%s0 + $0x18] sm:$0xff]
  %v18 = vld [vmem:[%s0 + $0x20] sm:$0xff]
  %v19 = vld [vmem:[%s0 + $0x28] sm:$0xff]
  %v20 = vld [vmem:[%s0 + $0x30] sm:$0xff]
  %v21 = vld [vmem:[%s0 + $0x38] sm:$0xff]
  %v22 = vld [vmem:[%s0 + $0x40] sm:$0xff]
  %v23 = vld [vmem:[%s0 + $0x48] sm:$0xff]
  %v24 = vld [vmem:[%s0 + $0x50] sm:$0xff]
  %v25 = vld [vmem:[%s0 + $0x58] sm:$0xff]
  %v26 = vld [vmem:[%s0 + $0x60] sm:$0xff]
  %v27 = vld [vmem:[%s0 + $0x68] sm:$0xff]
  %v28 = vld [vmem:[%s0 + $0x70] sm:$0xff]
  %v29 = vld [vmem:[%s0 + $0x78] sm:$0xff]
  %vm30 = vcmask 130048
  %31 = vst.msk [vmem:[%s3] sm:$0xff] %vm30, %v14
  %32 = vst.msk [vmem:[%s3 + $0x8] sm:$0xff] %vm30, %v15
  %33 = vst.msk [vmem:[%s3 + $0x10] sm:$0xff] %vm30, %v16
  %34 = vst.msk [vmem:[%s3 + $0x18] sm:$0xff] %vm30, %v17
  %35 = vst.msk [vmem:[%s3 + $0x20] sm:$0xff] %vm30, %v18
  %36 = vst.msk [vmem:[%s3 + $0x28] sm:$0xff] %vm30, %v19
  %37 = vst.msk [vmem:[%s3 + $0x30] sm:$0xff] %vm30, %v20
  %38 = vst.msk [vmem:[%s3 + $0x38] sm:$0xff] %vm30, %v21
  %39 = vst.msk [vmem:[%s3 + $0x40] sm:$0xff] %vm30, %v22
  %40 = vst.msk [vmem:[%s3 + $0x48] sm:$0xff] %vm30, %v23
  %41 = vst.msk [vmem:[%s3 + $0x50] sm:$0xff] %vm30, %v24
  %42 = vst.msk [vmem:[%s3 + $0x58] sm:$0xff] %vm30, %v25
  %43 = vst.msk [vmem:[%s3 + $0x60] sm:$0xff] %vm30, %v26
  %44 = vst.msk [vmem:[%s3 + $0x68] sm:$0xff] %vm30, %v27
  %45 = vst.msk [vmem:[%s3 + $0x70] sm:$0xff] %vm30, %v28
  %46 = vst.msk [vmem:[%s3 + $0x78] sm:$0xff] %vm30, %v29
  %v47 = vld [vmem:[%s1] sm:$0xff]
  %v48 = vld [vmem:[%s1 + $0x8] sm:$0xff]
  %v49 = vld [vmem:[%s1 + $0x10] sm:$0xff]
  %v50 = vld [vmem:[%s1 + $0x18] sm:$0xff]
  %v51 = vld [vmem:[%s1 + $0x20] sm:$0xff]
  %v52 = vld [vmem:[%s1 + $0x28] sm:$0xff]
  %v53 = vld [vmem:[%s1 + $0x30] sm:$0xff]
  %v54 = vld [vmem:[%s1 + $0x38] sm:$0xff]
  %v55 = vld [vmem:[%s1 + $0x40] sm:$0xff]
  %v56 = vld [vmem:[%s1 + $0x48] sm:$0xff]
  %v57 = vld [vmem:[%s1 + $0x50] sm:$0xff]
  %v58 = vld [vmem:[%s1 + $0x58] sm:$0xff]
  %v59 = vld [vmem:[%s1 + $0x60] sm:$0xff]
  %v60 = vld [vmem:[%s1 + $0x68] sm:$0xff]
  %v61 = vld [vmem:[%s1 + $0x70] sm:$0xff]
  %v62 = vld [vmem:[%s1 + $0x78] sm:$0xff]
  %79 = vrot.lane.b32.xlu0 %v47, 16
  %v80 = vpop.permute.xlu0 %79
  %81 = vrot.lane.b32.xlu0 %v48, 16
  %v82 = vpop.permute.xlu0 %81
  %83 = vrot.lane.b32.xlu0 %v49, 16
  %v84 = vpop.permute.xlu0 %83
  %85 = vrot.lane.b32.xlu0 %v50, 16
  %v86 = vpop.permute.xlu0 %85
  %87 = vrot.lane.b32.xlu0 %v51, 16
  %v88 = vpop.permute.xlu0 %87
  %89 = vrot.lane.b32.xlu0 %v52, 16
  %v90 = vpop.permute.xlu0 %89
  %91 = vrot.lane.b32.xlu0 %v53, 16
  %v92 = vpop.permute.xlu0 %91
  %93 = vrot.lane.b32.xlu0 %v54, 16
  %v94 = vpop.permute.xlu0 %93
  %95 = vrot.lane.b32.xlu0 %v55, 16
  %v96 = vpop.permute.xlu0 %95
  %97 = vrot.lane.b32.xlu0 %v56, 16
  %v98 = vpop.permute.xlu0 %97
  %99 = vrot.lane.b32.xlu0 %v57, 16
  %v100 = vpop.permute.xlu0 %99
  %101 = vrot.lane.b32.xlu0 %v58, 16
  %v102 = vpop.permute.xlu0 %101
  %103 = vrot.lane.b32.xlu0 %v59, 16
  %v104 = vpop.permute.xlu0 %103
  %105 = vrot.lane.b32.xlu0 %v60, 16
  %v106 = vpop.permute.xlu0 %105
  %107 = vrot.lane.b32.xlu0 %v61, 16
  %v108 = vpop.permute.xlu0 %107
  %109 = vrot.lane.b32.xlu0 %v62, 16
  %v110 = vpop.permute.xlu0 %109
  %vm127 = vcmask 195712
  %128 = vst.msk [vmem:[%s3] sm:$0xff] %vm127, %v80
  %129 = vst.msk [vmem:[%s3 + $0x8] sm:$0xff] %vm127, %v82
  %130 = vst.msk [vmem:[%s3 + $0x10] sm:$0xff] %vm127, %v84
  %131 = vst.msk [vmem:[%s3 + $0x18] sm:$0xff] %vm127, %v86
  %132 = vst.msk [vmem:[%s3 + $0x20] sm:$0xff] %vm127, %v88
  %133 = vst.msk [vmem:[%s3 + $0x28] sm:$0xff] %vm127, %v90
  %134 = vst.msk [vmem:[%s3 + $0x30] sm:$0xff] %vm127, %v92
  %135 = vst.msk [vmem:[%s3 + $0x38] sm:$0xff] %vm127, %v94
  %136 = vst.msk [vmem:[%s3 + $0x40] sm:$0xff] %vm127, %v96
  %137 = vst.msk [vmem:[%s3 + $0x48] sm:$0xff] %vm127, %v98
  %138 = vst.msk [vmem:[%s3 + $0x50] sm:$0xff] %vm127, %v100
  %139 = vst.msk [vmem:[%s3 + $0x58] sm:$0xff] %vm127, %v102
  %140 = vst.msk [vmem:[%s3 + $0x60] sm:$0xff] %vm127, %v104
  %141 = vst.msk [vmem:[%s3 + $0x68] sm:$0xff] %vm127, %v106
  %142 = vst.msk [vmem:[%s3 + $0x70] sm:$0xff] %vm127, %v108
  %143 = vst.msk [vmem:[%s3 + $0x78] sm:$0xff] %vm127, %v110
  %v144 = vld [vmem:[%s2] sm:$0xff]
  %v145 = vld [vmem:[%s2 + $0x8] sm:$0xff]
  %v146 = vld [vmem:[%s2 + $0x10] sm:$0xff]
  %v147 = vld [vmem:[%s2 + $0x18] sm:$0xff]
  %v148 = vld [vmem:[%s2 + $0x20] sm:$0xff]
  %v149 = vld [vmem:[%s2 + $0x28] sm:$0xff]
  %v150 = vld [vmem:[%s2 + $0x30] sm:$0xff]
  %v151 = vld [vmem:[%s2 + $0x38] sm:$0xff]
  %v152 = vld [vmem:[%s2 + $0x40] sm:$0xff]
  %v153 = vld [vmem:[%s2 + $0x48] sm:$0xff]
  %v154 = vld [vmem:[%s2 + $0x50] sm:$0xff]
  %v155 = vld [vmem:[%s2 + $0x58] sm:$0xff]
  %v156 = vld [vmem:[%s2 + $0x60] sm:$0xff]
  %v157 = vld [vmem:[%s2 + $0x68] sm:$0xff]
  %v158 = vld [vmem:[%s2 + $0x70] sm:$0xff]
  %v159 = vld [vmem:[%s2 + $0x78] sm:$0xff]
  %176 = vrot.lane.b32.xlu0 %v144, 24
  %v177 = vpop.permute.xlu0 %176
  %178 = vrot.lane.b32.xlu0 %v145, 24
  %v179 = vpop.permute.xlu0 %178
  %180 = vrot.lane.b32.xlu0 %v146, 24
  %v181 = vpop.permute.xlu0 %180
  %182 = vrot.lane.b32.xlu0 %v147, 24
  %v183 = vpop.permute.xlu0 %182
  %184 = vrot.lane.b32.xlu0 %v148, 24
  %v185 = vpop.permute.xlu0 %184
  %186 = vrot.lane.b32.xlu0 %v149, 24
  %v187 = vpop.permute.xlu0 %186
  %188 = vrot.lane.b32.xlu0 %v150, 24
  %v189 = vpop.permute.xlu0 %188
  %190 = vrot.lane.b32.xlu0 %v151, 24
  %v191 = vpop.permute.xlu0 %190
  %192 = vrot.lane.b32.xlu0 %v152, 24
  %v193 = vpop.permute.xlu0 %192
  %194 = vrot.lane.b32.xlu0 %v153, 24
  %v195 = vpop.permute.xlu0 %194
  %196 = vrot.lane.b32.xlu0 %v154, 24
  %v197 = vpop.permute.xlu0 %196
  %198 = vrot.lane.b32.xlu0 %v155, 24
  %v199 = vpop.permute.xlu0 %198
  %200 = vrot.lane.b32.xlu0 %v156, 24
  %v201 = vpop.permute.xlu0 %200
  %202 = vrot.lane.b32.xlu0 %v157, 24
  %v203 = vpop.permute.xlu0 %202
  %204 = vrot.lane.b32.xlu0 %v158, 24
  %v205 = vpop.permute.xlu0 %204
  %206 = vrot.lane.b32.xlu0 %v159, 24
  %v207 = vpop.permute.xlu0 %206
  %vm224 = vcmask 457920
  %225 = vst.msk [vmem:[%s3] sm:$0xff] %vm224, %v177
  %226 = vst.msk [vmem:[%s3 + $0x8] sm:$0xff] %vm224, %v179
  %227 = vst.msk [vmem:[%s3 + $0x10] sm:$0xff] %vm224, %v181
  %228 = vst.msk [vmem:[%s3 + $0x18] sm:$0xff] %vm224, %v183
  %229 = vst.msk [vmem:[%s3 + $0x20] sm:$0xff] %vm224, %v185
  %230 = vst.msk [vmem:[%s3 + $0x28] sm:$0xff] %vm224, %v187
  %231 = vst.msk [vmem:[%s3 + $0x30] sm:$0xff] %vm224, %v189
  %232 = vst.msk [vmem:[%s3 + $0x38] sm:$0xff] %vm224, %v191
  %233 = vst.msk [vmem:[%s3 + $0x40] sm:$0xff] %vm224, %v193
  %234 = vst.msk [vmem:[%s3 + $0x48] sm:$0xff] %vm224, %v195
  %235 = vst.msk [vmem:[%s3 + $0x50] sm:$0xff] %vm224, %v197
  %236 = vst.msk [vmem:[%s3 + $0x58] sm:$0xff] %vm224, %v199
  %237 = vst.msk [vmem:[%s3 + $0x60] sm:$0xff] %vm224, %v201
  %238 = vst.msk [vmem:[%s3 + $0x68] sm:$0xff] %vm224, %v203
  %239 = vst.msk [vmem:[%s3 + $0x70] sm:$0xff] %vm224, %v205
  %240 = vst.msk [vmem:[%s3 + $0x78] sm:$0xff] %vm224, %v207
  // Predicated region
  $region14: #{tpu_custom_call.1} parent=0 // pred_check
    _
  $region15: #{tpu_custom_call.1} parent=0 // pred_check_branch
    %242 = sbr.rel (0) target = $region17
  $region16: #{tpu_custom_call.1} parent=0 // pred_region
    _
  $region17: #{tpu_custom_call.1} parent=0 // pred_fallthru
    _
  // Predicated region
  $region18: #{tpu_custom_call.1} parent=0 // pred_check
    _
  $region19: #{tpu_custom_call.1} parent=0 // pred_check_branch
    %244 = sbr.rel (0) target = $region21
  $region20: #{tpu_custom_call.1} parent=0 // pred_region
    _
  $region21: #{tpu_custom_call.1} parent=0 // pred_fallthru
    _

</llo_original>
